<compile_context>
chip_gen: v6e
topology: v6e:2x2x1
jax: 0.10.0
libtpu: 0.0.40
codegen_flags: <defaults>
</compile_context>

<pallas_src>
import functools

import jax
import jax.numpy as jnp
from jax.experimental import pallas as pl
from jax.experimental.pallas import tpu as pltpu


# ---------------------------------------------------------------------------
# Kernels
# ---------------------------------------------------------------------------

def _softmax_kernel(x_ref, o_ref, *, compute_dtype):
    """Full-D row-tile softmax; reduction only over the lane (last) dim."""
    x = x_ref[...].astype(compute_dtype)
    m = jnp.max(x, axis=-1, keepdims=True)
    e = jnp.exp(x - m)                                              # EUP
    s = jnp.sum(e.astype(jnp.float32), axis=-1, keepdims=True)      # f32 accumulate
    inv = (1.0 / s).astype(compute_dtype)                           # exact; (rows,1) is tiny
    o_ref[...] = (e * inv).astype(o_ref.dtype)


def _softmax_packed_kernel(x_ref, o_ref, *, g, d):
    """Lane-packed small-D softmax: each 128-lane row holds g independent
    length-d segments. Segmented max/sum via iota+where (native lane layout,
    no reshape/relayout); exp and the division are done once full-width."""
    x = x_ref[...].astype(jnp.float32)
    lane = jax.lax.broadcasted_iota(jnp.int32, x.shape, 1)
    seg = lane // d
    m_b = jnp.zeros_like(x)
    for j in range(g):                                   # static unroll, g <= 16
        in_seg = seg == j
        mj = jnp.max(jnp.where(in_seg, x, -jnp.inf), axis=-1, keepdims=True)
        m_b = jnp.where(in_seg, mj, m_b)
    e = jnp.exp(x - m_b)
    s_b = jnp.ones_like(x)
    for j in range(g):
        in_seg = seg == j
        sj = jnp.sum(jnp.where(in_seg, e, 0.0), axis=-1, keepdims=True)
        s_b = jnp.where(in_seg, sj, s_b)
    o_ref[...] = (e / s_b).astype(o_ref.dtype)


def _softmax_stats_kernel(x_ref, m_ref, l_ref, *, d_total, d_chunk):
    """Chunked path, pass 1: running per-row (max, sum-of-exp) across D chunks.
    The (row_tile, 1) outputs are resident across the last ('arbitrary') axis."""
    j = pl.program_id(1)

    @pl.when(j == 0)
    def _():
        m_ref[...] = jnp.full_like(m_ref, -jnp.inf)
        l_ref[...] = jnp.zeros_like(l_ref)

    x = x_ref[...].astype(jnp.float32)
    col = j * d_chunk + jax.lax.broadcasted_iota(jnp.int32, x.shape, 1)
    valid = col < d_total                                 # mask ragged D columns
    xm = jnp.where(valid, x, -jnp.inf)

    m_prev = m_ref[...]
    m_new = jnp.maximum(m_prev, jnp.max(xm, axis=-1, keepdims=True))
    e = jnp.where(valid, jnp.exp(x - m_new), 0.0)
    l_ref[...] = l_ref[...] * jnp.exp(m_prev - m_new) + jnp.sum(e, axis=-1, keepdims=True)
    m_ref[...] = m_new


def _softmax_scale_kernel(x_ref, m_ref, l_ref, o_ref):
    """Chunked path, pass 2: out = exp(x - m) / l. OOB writes of ragged blocks
    are dropped by Pallas."""
    x = x_ref[...].astype(jnp.float32)
    e = jnp.exp(x - m_ref[...])
    o_ref[...] = (e / l_ref[...]).astype(o_ref.dtype)


# ---------------------------------------------------------------------------
# Tiling helpers
# ---------------------------------------------------------------------------

def _round_up(x, m):
    return ((x + m - 1) // m) * m


def _vmem_capacity_bytes():
    try:
        return int(pltpu.get_tpu_info().vmem_capacity_bytes)
    except Exception:
        return 64 * 1024 * 1024       # conservative fallback (v7x per-core VMEM)


def _target_tile_bytes(vmem_cap):
    # ~4 MiB input tiles on every generation: keeps the fixed ~0.35 us per-step
    # overhead ~10% of the DMA time even at v7x's ~3.2 TB/s.
    return min(4 * 1024 * 1024, vmem_cap // 16)


def _vmem_limit_bytes(row_tile, d_block, itemsize, c_itemsize, vmem_cap):
    # Double-buffered in + out tiles, plus in-kernel temporaries.
    tile_bytes = row_tile * d_block * itemsize
    need = 4 * tile_bytes + 4 * row_tile * d_block * c_itemsize
    return int(min(max(2 * need, 32 * 1024 * 1024), vmem_cap * 3 // 4))


def _pick_row_tile(rows, d, itemsize, vmem_cap):
    """Largest row tile with ~4 MiB working set, rounded to sublane packing,
    preferring an even (>=2) number of grid steps (v7x: two TensorCores share
    the single 'parallel' axis)."""
    sublane = 8 * max(1, 4 // itemsize)
    if rows <= sublane:
        return rows                                      # block dims == full dims
    row_tile = max(sublane, _target_tile_bytes(vmem_cap) // max(1, d * itemsize))
    row_tile = max(sublane, (row_tile // sublane) * sublane)
    half_rows = _round_up(max(1, (rows + 1) // 2), sublane)
    row_tile = max(sublane, min(row_tile, half_rows))
    nsteps = pl.cdiv(rows, row_tile)
    if nsteps > 1 and nsteps % 2 == 1:
        cand = max(sublane, _round_up(pl.cdiv(rows, nsteps + 1), sublane))
        if pl.cdiv(rows, cand) % 2 == 0:
            row_tile = cand
    return row_tile


# ---------------------------------------------------------------------------
# Path dispatchers
# ---------------------------------------------------------------------------

def _plain_softmax(x2, vmem_cap, compute_dtype, c_itemsize):
    rows, d = x2.shape
    itemsize = x2.dtype.itemsize
    row_tile = _pick_row_tile(rows, d, itemsize, vmem_cap)
    return pl.pallas_call(
        functools.partial(_softmax_kernel, compute_dtype=compute_dtype),
        out_shape=jax.ShapeDtypeStruct((rows, d), x2.dtype),
        grid_spec=pltpu.PrefetchScalarGridSpec(
            num_scalar_prefetch=0,
            grid=(pl.cdiv(rows, row_tile),),
            in_specs=[pl.BlockSpec((row_tile, d), lambda i: (i, 0))],
            out_specs=pl.BlockSpec((row_tile, d), lambda i: (i, 0)),
        ),
        compiler_params=pltpu.CompilerParams(
            dimension_semantics=("parallel",),
            vmem_limit_bytes=_vmem_limit_bytes(row_tile, d, itemsize, c_itemsize, vmem_cap),
        ),
        cost_estimate=pl.CostEstimate(flops=5 * rows * d, transcendentals=rows * d,
                                      bytes_accessed=2 * rows * d * itemsize),
    )(x2)


def _packed_softmax(x2, g, vmem_cap):
    rows, d = x2.shape
    itemsize = x2.dtype.itemsize
    xp = x2.reshape(rows // g, g * d)                    # metadata-only (contiguous)
    rows_p, d_p = xp.shape                               # d_p == 128
    row_tile = _pick_row_tile(rows_p, d_p, itemsize, vmem_cap)
    out = pl.pallas_call(
        functools.partial(_softmax_packed_kernel, g=g, d=d),
        out_shape=jax.ShapeDtypeStruct((rows_p, d_p), x2.dtype),
        grid_spec=pltpu.PrefetchScalarGridSpec(
            num_scalar_prefetch=0,
            grid=(pl.cdiv(rows_p, row_tile),),
            in_specs=[pl.BlockSpec((row_tile, d_p), lambda i: (i, 0))],
            out_specs=pl.BlockSpec((row_tile, d_p), lambda i: (i, 0)),
        ),
        compiler_params=pltpu.CompilerParams(
            dimension_semantics=("parallel",),
            vmem_limit_bytes=_vmem_limit_bytes(row_tile, d_p, itemsize, 4, vmem_cap),
        ),
        cost_estimate=pl.CostEstimate(flops=(4 + 4 * g) * rows_p * d_p,
                                      transcendentals=rows_p * d_p,
                                      bytes_accessed=2 * rows_p * d_p * itemsize),
    )(xp)
    return out.reshape(rows, d)


def _chunked_softmax(x2, d_chunk, vmem_cap):
    rows, d = x2.shape
    itemsize = x2.dtype.itemsize
    sublane = 8 * max(1, 4 // itemsize)
    row_tile = rows if rows <= sublane else min(_round_up(rows, sublane), 8 * sublane)
    if d_chunk is None:
        d_chunk = _target_tile_bytes(vmem_cap) // max(1, row_tile * itemsize)
    d_chunk = max(128, (min(d_chunk, _round_up(d, 128)) // 128) * 128)

    grid = (pl.cdiv(rows, row_tile), pl.cdiv(d, d_chunk))
    vmem_limit = _vmem_limit_bytes(row_tile, d_chunk, itemsize, 4, vmem_cap)

    # Pass 1: running per-row (max, sum-of-exp) across D chunks.
    m, l = pl.pallas_call(
        functools.partial(_softmax_stats_kernel, d_total=d, d_chunk=d_chunk),
        out_shape=(jax.ShapeDtypeStruct((rows, 1), jnp.float32),
                   jax.ShapeDtypeStruct((rows, 1), jnp.float32)),
        grid_spec=pltpu.PrefetchScalarGridSpec(
            num_scalar_prefetch=0,
            grid=grid,
            in_specs=[pl.BlockSpec((row_tile, d_chunk), lambda i, j: (i, j))],
            out_specs=(pl.BlockSpec((row_tile, 1), lambda i, j: (i, 0)),
                       pl.BlockSpec((row_tile, 1), lambda i, j: (i, 0))),
        ),
        compiler_params=pltpu.CompilerParams(
            dimension_semantics=("parallel", "arbitrary"),
            vmem_limit_bytes=vmem_limit,
        ),
        cost_estimate=pl.CostEstimate(flops=5 * rows * d, transcendentals=rows * d,
                                      bytes_accessed=rows * d * itemsize),
    )(x2)

    # Pass 2: normalize.
    return pl.pallas_call(
        _softmax_scale_kernel,
        out_shape=jax.ShapeDtypeStruct((rows, d), x2.dtype),
        grid_spec=pltpu.PrefetchScalarGridSpec(
            num_scalar_prefetch=0,
            grid=grid,
            in_specs=[pl.BlockSpec((row_tile, d_chunk), lambda i, j: (i, j)),
                      pl.BlockSpec((row_tile, 1), lambda i, j: (i, 0)),
                      pl.BlockSpec((row_tile, 1), lambda i, j: (i, 0))],
            out_specs=pl.BlockSpec((row_tile, d_chunk), lambda i, j: (i, j)),
        ),
        compiler_params=pltpu.CompilerParams(
            dimension_semantics=("parallel", "parallel"),
            vmem_limit_bytes=vmem_limit,
        ),
        cost_estimate=pl.CostEstimate(flops=3 * rows * d, transcendentals=rows * d,
                                      bytes_accessed=2 * rows * d * itemsize),
    )(x2, m, l)


def softmax_lastdim(x, *, d_chunk=None):
    """Numerically-stable softmax over the last dim (== torch.softmax(x, dim=-1))."""
    orig_shape = x.shape
    d = orig_shape[-1]
    # NOTE: metadata-only for contiguous inputs; a strided/transposed input
    # would insert a copy here (perf only, not numerics).
    x2 = x.reshape(-1, d)
    rows = x2.shape[0]
    itemsize = x2.dtype.itemsize
    compute_dtype = jnp.bfloat16 if x2.dtype == jnp.bfloat16 else jnp.float32
    c_itemsize = 2 if compute_dtype == jnp.bfloat16 else 4
    vmem_cap = _vmem_capacity_bytes()
    sublane = 8 * max(1, 4 // itemsize)

    # (3) D-chunked two-pass path: vocab-scale D where even a minimum-height
    # full-D row strip (double-buffered in/out + temporaries) would blow VMEM.
    min_full_d_need = sublane * d * (4 * itemsize + 4 * c_itemsize)
    if d > 128 and (d_chunk is not None or min_full_d_need > vmem_cap // 2):
        return _chunked_softmax(x2, d_chunk, vmem_cap).reshape(orig_shape)

    # (2) Lane-packing for small D: keeps HBM loads/stores lane-dense.
    if 8 <= d < 128 and 128 % d == 0:
        g = 128 // d
        if rows % g == 0 and rows >= g:
            return _packed_softmax(x2, g, vmem_cap).reshape(orig_shape)

    # (1) Plain full-D row tiles.
    return _plain_softmax(x2, vmem_cap, compute_dtype, c_itemsize).reshape(orig_shape)


# ---------------------------------------------------------------------------
# Self-test
# ---------------------------------------------------------------------------

if __name__ == "__main__":
    key = jax.random.PRNGKey(0)
    k1, k2, k3, k4, k5 = jax.random.split(key, 5)

    def check(x, tol, **kw):
        y = softmax_lastdim(x, **kw)
        jax.block_until_ready(y)
        ref = jax.nn.softmax(x.astype(jnp.float32), axis=-1)
        assert y.shape == x.shape and y.dtype == x.dtype
        err = jnp.max(jnp.abs(y.astype(jnp.float32) - ref))
        assert err < tol, f"softmax mismatch: {err} (tol {tol}) shape={x.shape} dtype={x.dtype}"

    # Plain path, lane-dense D=128.
    check(jax.random.normal(k1, (2, 8, 128), dtype=jnp.float32), 1e-5)
    # Lane-packed small-D path (D=32 -> g=4, rows divisible by g).
    check(jax.random.normal(k2, (4, 8, 32), dtype=jnp.float32), 1e-5)
    # Ragged rows + small D falls back to the plain (masked-store) path.
    check(jax.random.normal(k3, (3, 7, 32), dtype=jnp.float32), 1e-5)
    # D-chunked two-pass path (chunk forced small to exercise it at test size).
    check(jax.random.normal(k4, (2, 8, 512), dtype=jnp.float32), 1e-5, d_chunk=128)
    # bf16 input keeps bf16 compute (f32 sum); coarser tolerance from bf16 exp.
    check(jax.random.normal(k5, (2, 8, 128), dtype=jnp.bfloat16), 2e-2)

    print("KERNEL_OK")
</pallas_src>

<mosaic_0001>
module attributes {stable_mosaic.version = 11 : i64} {
  func.func @_softmax_kernel(%arg0: i32, %arg1: memref<8x128xf32, #tpu.memory_space<vmem>>, %arg2: memref<8x128xf32, #tpu.memory_space<vmem>>) attributes {dimension_semantics = [#tpu.dimension_semantics<parallel>], iteration_bounds = array<i64: 2>, scalar_prefetch = 0 : i64, scratch_operands = 0 : i64, tpu.core_type = #tpu.core_type<tc>, window_params = [{transform_indices = @transform_0, window_bounds = array<i64: 8, 128>}, {transform_indices = @transform_1, window_bounds = array<i64: 8, 128>}]} {
    %c0 = arith.constant 0 : index
    %c0_0 = arith.constant 0 : index
    %0 = vector.load %arg1[%c0, %c0_0] : memref<8x128xf32, #tpu.memory_space<vmem>>, vector<8x128xf32>
    %cst = arith.constant dense<0xFF800000> : vector<8xf32>
    %1 = vector.multi_reduction <maximumf>, %0, %cst [1] : vector<8x128xf32> to vector<8xf32>
    %2 = vector.shape_cast %1 : vector<8xf32> to vector<8x1xf32>
    %3 = vector.broadcast %2 : vector<8x1xf32> to vector<8x128xf32>
    %4 = arith.subf %0, %3 : vector<8x128xf32>
    %5 = math.exp %4 : vector<8x128xf32>
    %cst_1 = arith.constant dense<0.000000e+00> : vector<8xf32>
    %6 = vector.multi_reduction <add>, %5, %cst_1 [1] : vector<8x128xf32> to vector<8xf32>
    %7 = vector.shape_cast %6 : vector<8xf32> to vector<8x1xf32>
    %cst_2 = arith.constant 1.000000e+00 : f32
    %8 = vector.broadcast %cst_2 : f32 to vector<8x1xf32>
    %9 = arith.divf %8, %7 : vector<8x1xf32>
    %10 = vector.broadcast %9 : vector<8x1xf32> to vector<8x128xf32>
    %11 = arith.mulf %5, %10 : vector<8x128xf32>
    %c0_3 = arith.constant 0 : index
    %c0_4 = arith.constant 0 : index
    %12 = vector.load %arg2[%c0_3, %c0_4] : memref<8x128xf32, #tpu.memory_space<vmem>>, vector<8x128xf32>
    tpu.vector_store %arg2[%c0_3, %c0_4], %11 {strides = array<i32>} : memref<8x128xf32, #tpu.memory_space<vmem>>, vector<8x128xf32>,
    return
  }
  func.func @transform_0(%arg0: i32) -> (i32, i32) {
    %c0_i32 = arith.constant 0 : i32
    %c0_i32_0 = arith.constant 0 : i32
    return %arg0, %c0_i32 : i32, i32
  }
  func.func @transform_1(%arg0: i32) -> (i32, i32) {
    %c0_i32 = arith.constant 0 : i32
    %c0_i32_0 = arith.constant 0 : i32
    return %arg0, %c0_i32 : i32, i32
  }
}

</mosaic_0001>

<llo_original>
// kernel: tpu_custom_call.1
$region0: #{tpu_custom_call.1}
  #allocation0 [shape = 'u32[]', space=smem, size = 0x4, offset = 0x4, fixed_abs, tag = 'smem constant byte address 0x4 - core index']
  #allocation1 [shape = 'u32[144,128]{1,0:T(1,128)}', space=vmem, size = 0x12000, scoped, tag = 'internal scratch']
  %s0 = inlined_call_operand.hbm [shape: f32[16,128], index: 0, kind: input, shape index: {}]
  %s1 = inlined_call_operand.hbm [shape: f32[16,128], index: 1, kind: output, shape index: {}]
  %s2 = sld [smem:[#allocation0]]
  $region41: #{tpu_custom_call.1} parent=0
    _
  %s4 = ssub.s32 1, %s2
  %s5 = scalar_select 0, %s4, %s2
  $region1: #{tpu_custom_call.1} parent=0
    #allocation2 [shape = 'u8[8192]{0}', space=vmem, size = 0x2000, scoped, tag = 'input window, operand 0']
    #allocation3 [shape = 's32[2]{0}', space=sflag, size = 0x8, scoped, tag = 'scoped memory for tpu_custom_call.1']
    #allocation4 [shape = 's32[2]{0}', space=sflag, size = 0x8, scoped, tag = 'scoped memory for tpu_custom_call.1']
    #allocation5 [shape = 'u8[8192]{0}', space=vmem, size = 0x2000, scoped, tag = 'output window, operand 0']
    %6 = vsyncpa [#allocation3], 0
    %s7 = scalar_lea.sflag [#allocation3], 1
    %8 = vsyncpa %s7, 0
    %9 = vsyncpa [#allocation4], 0
    %s10 = scalar_lea.sflag [#allocation4], 1
    %11 = vsyncpa %s10, 0
    loop: start=0, step=1, limit=4
    $region2: #{tpu_custom_call.1} parent=1 // loop_pre_header
      _
    $region3: #{tpu_custom_call.1} parent=1 // loop_header
      %s13 = sphi 0, %s17
      %p14 = scmp.ge.s32.totalorder %s13, 4
      %s23 = sphi 0, %s25
      %s26 = sphi 0, %s23
      %s27 = sphi 0, %s26
      %s43 = sphi 0, %s27
      %s49 = sphi 0, %s51
      %s52 = sphi 0, %s49
      %s53 = sphi 0, %s52
      %s69 = sphi 0, %s53
    $region4: #{tpu_custom_call.1} parent=1 // loop_header_branch
      %16 = sbr.rel (%p14) target = $region8
    $region5: #{tpu_custom_call.1} parent=1 // loop_body
      %s18 = ssub.s32 %s13, 1
      %s19 = ssub.s32 %s13, 2
      %s20 = sadd.s32 %s13, 1
      %s21 = ssub.s32 %s13, %s20
      %p22 = scmp.eq.s32.totalorder %s21, 0
      %s24 = sadd.s32 %s23, 1
      %s25 = scalar_select %p22, %s23, %s24
      %p28 = pneg %p22
      %p29 = scmp.eq.s32.totalorder %s13, 1
      %p30 = por %p28, %p29
      %p31 = scmp.ne.s32.totalorder %s23, %s26
      %p32 = scmp.eq.s32.totalorder %s13, 0
      %p33 = por %p31, %p32
      %p34 = scmp.ne.s32.totalorder %s23, %s26
      %p35 = scmp.eq.s32.totalorder %s18, 1
      %p36 = por %p34, %p35
      %p37 = scmp.ne.s32.totalorder %s26, %s27
      %p38 = scmp.eq.s32.totalorder %s18, 0
      %p39 = por %p37, %p38
      %p40 = scmp.ne.s32.totalorder %s26, %s27
      %p41 = scmp.eq.s32.totalorder %s19, 1
      %p42 = por %p40, %p41
      %p44 = scmp.ne.s32.totalorder %s27, %s43
      %p45 = scmp.eq.s32.totalorder %s19, 0
      %p46 = por %p44, %p45
      %s47 = ssub.s32 %s13, %s20
      %p48 = scmp.eq.s32.totalorder %s47, 0
      %s50 = sadd.s32 %s49, 1
      %s51 = scalar_select %p48, %s49, %s50
      %p54 = pneg %p48
      %p55 = scmp.eq.s32.totalorder %s13, 1
      %p56 = por %p54, %p55
      %p57 = scmp.ne.s32.totalorder %s49, %s52
      %p58 = scmp.eq.s32.totalorder %s13, 0
      %p59 = por %p57, %p58
      %p60 = scmp.ne.s32.totalorder %s49, %s52
      %p61 = scmp.eq.s32.totalorder %s18, 1
      %p62 = por %p60, %p61
      %p63 = scmp.ne.s32.totalorder %s52, %s53
      %p64 = scmp.eq.s32.totalorder %s18, 0
      %p65 = por %p63, %p64
      %p66 = scmp.ne.s32.totalorder %s52, %s53
      %p67 = scmp.eq.s32.totalorder %s19, 1
      %p68 = por %p66, %p67
      %p70 = scmp.ne.s32.totalorder %s53, %s69
      %p71 = scmp.eq.s32.totalorder %s19, 0
      %p72 = por %p70, %p71
      %p73 = scmp.le.s32.totalorder 1, %s13
      %p74 = scmp.lt.s32.totalorder %s13, 3
      %p75 = pnand %p73, %p74
      %p76 = pneg %p75
      // Predicated region
      $region9: #{tpu_custom_call.1} parent=5 // pred_check
        _
      $region10: #{tpu_custom_call.1} parent=5 // pred_check_branch
        %78 = sbr.rel (%p75) target = $region12
      $region11: #{tpu_custom_call.1} parent=5 // pred_region
        %s79 = ssub.s32 %s13, 1
      $region12: #{tpu_custom_call.1} parent=5 // pred_fallthru
        _
      %p80 = scmp.lt.s32.totalorder %s13, 2
      // Predicated region
      $region13: #{tpu_custom_call.1} parent=5 // pred_check
        %p81 = pneg %p80
      $region14: #{tpu_custom_call.1} parent=5 // pred_check_branch
        %83 = sbr.rel (%p81) target = $region16
      $region15: #{tpu_custom_call.1} parent=5 // pred_region
        // Predicated region
        $region17: #{tpu_custom_call.1} parent=15 // pred_check
          %p84 = pneg %p33
        $region18: #{tpu_custom_call.1} parent=15 // pred_check_branch
          %86 = sbr.rel (%p84) target = $region20
        $region19: #{tpu_custom_call.1} parent=15 // pred_region
          %s87 = sand.u32 %s23, 1
          %s88 = scalar_lea.sflag [#allocation3], %s87
          %s89 = sand.u32 %s23, 1
          %s90 = smul.addr %s89, 8
          %s91 = scalar_lea.vmem [#allocation2], %s90
          %s93 = ssub.s32 128, 128
          %94 = vsyncadd %s88, %s93
          %s95 = smul.addr %s13, 128
          %s96 = scalar_lea.hbm %s0, %s95
          %s98 = sshll.u32 %s91, 4
          %s99 = int_to_ptr.vmem [resolvable:$true] %s98
          %101 = dma.hbm_to_vmem [thread:$0]  %s96, 128, %s99, %s88
        $region20: #{tpu_custom_call.1} parent=15 // pred_fallthru
          _
      $region16: #{tpu_custom_call.1} parent=5 // pred_fallthru
        _
      %p102 = scmp.le.s32.totalorder 1, %s13
      %p103 = scmp.lt.s32.totalorder %s13, 3
      %p104 = pnand %p102, %p103
      %p105 = pneg %p104
      // Predicated region
      $region21: #{tpu_custom_call.1} parent=5 // pred_check
        _
      $region22: #{tpu_custom_call.1} parent=5 // pred_check_branch
        %107 = sbr.rel (%p104) target = $region24
      $region23: #{tpu_custom_call.1} parent=5 // pred_region
        %s108 = ssub.s32 %s13, 1
        %s109 = sand.u32 %s26, 1
        %s110 = scalar_lea.sflag [#allocation3], %s109
        %s111 = sand.u32 %s26, 1
        %s112 = smul.addr %s111, 8
        %s113 = scalar_lea.vmem [#allocation2], %s112
        // Predicated region
        $region25: #{tpu_custom_call.1} parent=23 // pred_check
          %p114 = pneg %p39
        $region26: #{tpu_custom_call.1} parent=23 // pred_check_branch
          %116 = sbr.rel (%p114) target = $region28
        $region27: #{tpu_custom_call.1} parent=23 // pred_region
          %117 = dma.done %s110, 128
        $region28: #{tpu_custom_call.1} parent=23 // pred_fallthru
          _
        %s118 = sand.u32 %s26, 1
        %s119 = scalar_lea.sflag [#allocation3], %s118
        %s120 = sand.u32 %s26, 1
        %s121 = smul.addr %s120, 8
        %s122 = scalar_lea.vmem [#allocation2], %s121
        %p123 = pneg %p39
        %p124 = pneg %p36
        %p125 = pneg %p65
        %p126 = pneg %p62
        %s127 = sand.u32 %s52, 1
        %s128 = scalar_lea.sflag [#allocation4], %s127
        %s129 = sand.u32 %s52, 1
        %s130 = smul.addr %s129, 8
        %s131 = scalar_lea.vmem [#allocation5], %s130
        %v132 = vld [vmem:[%s113] sm:$0xff]
        %133 = vmax.xlane.f32.xlu0 %v132
        %v134 = vpop.xlane.xlu0 %133
        %v135 = vsub.f32 %v132, %v134
        %v136 = vmul.f32 %v135, 1.442695
        %v137 = vpow.pop %v136
        %138 = vadd.xlane.f32.xlu0 %v137
        %v139 = vpop.xlane.xlu0 %138
        %v140 = vrcp.pop %v139
        %v141 = vmul.f32 1.0, %v140
        %v142 = vmul.f32 %v137, %v141
        %143 = vst [vmem:[%s131] sm:$0xff] %v142
        %s144 = sand.u32 %s52, 1
        %s145 = scalar_lea.sflag [#allocation4], %s144
        %s146 = sand.u32 %s52, 1
        %s147 = smul.addr %s146, 8
        %s148 = scalar_lea.vmem [#allocation5], %s147
        // Predicated region
        $region29: #{tpu_custom_call.1} parent=23 // pred_check
          %p149 = pneg %p62
        $region30: #{tpu_custom_call.1} parent=23 // pred_check_branch
          %151 = sbr.rel (%p149) target = $region32
        $region31: #{tpu_custom_call.1} parent=23 // pred_region
          %s153 = ssub.s32 128, 128
          %154 = vsyncadd %s145, %s153
          %s155 = smul.addr %s18, 128
          %s156 = scalar_lea.hbm %s1, %s155
          %s158 = sshll.u32 %s148, 4
          %s159 = int_to_ptr.vmem [resolvable:$true] %s158
          %161 = dma.vmem_to_hbm [thread:$0]  %s159, 128, %s156, %s145
        $region32: #{tpu_custom_call.1} parent=23 // pred_fallthru
          _
      $region24: #{tpu_custom_call.1} parent=5 // pred_fallthru
        _
      %p162 = scmp.le.s32.totalorder 2, %s13
      // Predicated region
      $region33: #{tpu_custom_call.1} parent=5 // pred_check
        %p163 = pneg %p162
      $region34: #{tpu_custom_call.1} parent=5 // pred_check_branch
        %165 = sbr.rel (%p163) target = $region36
      $region35: #{tpu_custom_call.1} parent=5 // pred_region
        %s166 = ssub.s32 %s13, 2
        // Predicated region
        $region37: #{tpu_custom_call.1} parent=35 // pred_check
          %p167 = pneg %p68
        $region38: #{tpu_custom_call.1} parent=35 // pred_check_branch
          %169 = sbr.rel (%p167) target = $region40
        $region39: #{tpu_custom_call.1} parent=35 // pred_region
          %s170 = sand.u32 %s53, 1
          %s171 = scalar_lea.sflag [#allocation4], %s170
          %s172 = sand.u32 %s53, 1
          %s173 = smul.addr %s172, 8
          %s174 = scalar_lea.vmem [#allocation5], %s173
          %175 = dma.done %s171, 128
        $region40: #{tpu_custom_call.1} parent=35 // pred_fallthru
          _
      $region36: #{tpu_custom_call.1} parent=5 // pred_fallthru
        _
    $region6: #{tpu_custom_call.1} parent=1 // loop_footer
      %s17 = sadd.s32 1, %s13
    $region7: #{tpu_custom_call.1} parent=1 // loop_footer_branch
      %12 = sbr.rel target = $region3
    $region8: #{tpu_custom_call.1} parent=1 // loop_exit
      _
    %176 = vsyncpa [#allocation3], 1
    %s177 = scalar_lea.sflag [#allocation3], 1
    %178 = vsyncpa %s177, 1
    %179 = vsyncpa [#allocation4], 1
    %s180 = scalar_lea.sflag [#allocation4], 1
    %181 = vsyncpa %s180, 1

</llo_original>
